<compile_context>
chip_gen: v7x
topology: tpu7x:2x2x1
jax: 0.10.0
libtpu: 0.0.40
codegen_flags: <defaults>
</compile_context>

<pallas_src>
import functools

import jax
import jax.numpy as jnp
from jax import lax
from jax.experimental import pallas as pl
from jax.experimental.pallas import tpu as pltpu


# --------------------------------------------------------------------------- #
# Stage 1: per-sample soft-hinge loss + margin, streaming over the class axis. #
# --------------------------------------------------------------------------- #
def _per_sample_kernel(x_ref, tgt_ref, loss_ref, margin_ref,
                       m1_ref, m2_ref, tl_ref, es_ref, *,
                       num_classes, ragged, use_bf16_exp):
    ci = pl.program_id(1)
    nc = pl.num_programs(1)
    tb, tc = x_ref.shape

    @pl.when(ci == 0)
    def _init():
        m1_ref[...] = jnp.full_like(m1_ref, -jnp.inf)   # running max (top-1)
        m2_ref[...] = jnp.full_like(m2_ref, -jnp.inf)   # running top-2 second value
        tl_ref[...] = jnp.zeros_like(tl_ref)            # running target logit
        es_ref[...] = jnp.zeros_like(es_ref)            # running rescaled exp-sum

    x = x_ref[...].astype(jnp.float32)                  # (TB, TC), cast in-kernel
    tgt = tgt_ref[...]                                  # (TB, 1) int32
    neg_inf = jnp.float32(-jnp.inf)

    def accumulate(masked):
        # Global class index per lane.  Only the cdiv tail chunk can contain
        # padded lanes; `masked` is a trace-time constant, so full chunks emit
        # no mask compares / selects at all.
        gidx = jax.lax.broadcasted_iota(jnp.int32, (tb, tc), 1) + ci * tc
        if masked:
            valid = gidx < num_classes
            xm = jnp.where(valid, x, neg_inf)
            onehot = (gidx == tgt) & valid
        else:
            xm = x
            onehot = gidx == tgt

        # output[i, target[i]] contribution from this chunk.
        # NOTE: out-of-range targets silently contribute 0 (documented precondition).
        tl_ref[...] += jnp.sum(jnp.where(onehot, x, 0.0), axis=1, keepdims=True)

        # Chunk top-2 (duplicate-aware, matching torch.topk(k=2) semantics).
        cmax = jnp.max(xm, axis=1, keepdims=True)
        is_max = xm == cmax
        if masked:
            is_max = is_max & valid
        n_max = jnp.sum(is_max.astype(jnp.float32), axis=1, keepdims=True)
        max_lt = jnp.max(jnp.where(is_max, neg_inf, xm), axis=1, keepdims=True)
        csec = jnp.where(n_max >= 2.0, cmax, max_lt)

        # Merge running top-2 with chunk top-2.
        m1_old = m1_ref[...]
        m2_old = m2_ref[...]
        new_m1 = jnp.maximum(m1_old, cmax)
        new_m2 = jnp.maximum(jnp.minimum(m1_old, cmax), jnp.maximum(m2_old, csec))

        # Online logsumexp; the running max doubles as the lse max.
        # exp(-inf - finite) == 0 handles both the ci == 0 init and masked lanes.
        diff = xm - new_m1
        if use_bf16_exp:
            # bf16 EUP (v6e/v7x): ~2x transcendental throughput; argument <= 0
            # so bf16 is well-conditioned.  Accumulation stays in f32.
            ex = jnp.exp(diff.astype(jnp.bfloat16)).astype(jnp.float32)
        else:
            ex = jnp.exp(diff)
        es_ref[...] = es_ref[...] * jnp.exp(m1_old - new_m1) + \
            jnp.sum(ex, axis=1, keepdims=True)
        m1_ref[...] = new_m1
        m2_ref[...] = new_m2

    if ragged:
        @pl.when(ci < nc - 1)
        def _full_chunk():
            accumulate(masked=False)

        @pl.when(ci == nc - 1)
        def _tail_chunk():
            accumulate(masked=True)
    else:
        accumulate(masked=False)

    @pl.when(ci == nc - 1)
    def _finalize():
        tl = tl_ref[...]
        m1 = m1_ref[...]
        m2 = m2_ref[...]
        lse = m1 + jnp.log(es_ref[...])
        margin1 = tl - m1
        margin2 = tl - m2
        margin = jnp.where(margin1 > 0.0, margin1, margin2)
        fst = jnp.maximum(1.0 - margin, 0.0)
        snd = jnp.maximum(1.0 - tl + lse, 0.0)
        loss_ref[...] = jnp.where(margin >= 0.0, fst, snd)
        margin_ref[...] = margin


# --------------------------------------------------------------------------- #
# Stage 2: threshold + partial_opt selection + final scalar (O(B^2), tiled).   #
# --------------------------------------------------------------------------- #
def _selection_kernel(l_row_ref, l_col_ref, margin_ref, res_ref,
                      *, batch, row_tile, num_tiles, epsilon):
    f32 = jnp.float32
    l_row = l_row_ref[...]                               # (1, B) lane-dense
    l_col = l_col_ref[...]                               # (B, 1) sublane-dense
    margin = margin_ref[...]                             # (B, 1)

    # threshold = (1-eps)^2 * B + (1-eps) * #{margin < 0}
    n_neg = jnp.sum((margin < 0.0).astype(f32), keepdims=True)            # (1, 1)
    threshold = f32((1.0 - epsilon) ** 2 * batch) + f32(1.0 - epsilon) * n_neg

    col_idx = jax.lax.broadcasted_iota(jnp.int32, (1, batch), 1)          # sample j
    # Fold the rank count into the MXU dot: second (ones) column counts the
    # "before" set, removing the full-width XLU lane-sum per tile.
    rhs = jnp.concatenate([l_col, jnp.ones_like(l_col)], axis=1)          # (B, 2)

    def tile_update(t, carry):
        s_loss, s_bi = carry
        if isinstance(t, int):
            base = t * row_tile
        else:
            base = pl.multiple_of(t * row_tile, row_tile)
        l_i = l_col_ref[pl.ds(base, row_tile), :]                         # (TI, 1)
        row_idx = base + jax.lax.broadcasted_iota(jnp.int32, (row_tile, 1), 0)
        # before[i, j] <=> sample j appears at-or-before i in a stable
        # ascending sort of the losses (tie-break by index).
        tie = col_idx <= row_idx                                          # (TI, B)
        before = (l_row < l_i) | ((l_row == l_i) & tie)                   # (TI, B)
        bf = before.astype(f32)
        both = jnp.dot(bf, rhs, preferred_element_type=f32)               # (TI, 2)
        cum = both[:, 0:1]                                                # prefix sum
        rank = both[:, 1:2] - 1.0                                         # sort position
        sel = cum <= (threshold - rank)                                   # (TI, 1)
        s_loss = s_loss + jnp.sum(jnp.where(sel, l_i, 0.0), keepdims=True)
        bi = (l_i + 1e-10) / l_i                                          # Binary()
        s_bi = s_bi + jnp.sum(jnp.where(sel, bi, 0.0), keepdims=True)
        return s_loss, s_bi

    zero = jnp.zeros((1, 1), f32)
    if num_tiles == 1:
        s_loss, s_bi = tile_update(0, (zero, zero))
    else:
        # Unroll short tile loops so the LLO scheduler sees across iterations.
        s_loss, s_bi = lax.fori_loop(0, num_tiles, tile_update, (zero, zero),
                                     unroll=bool(num_tiles <= 8))

    npcl_1 = s_loss
    npcl_2 = threshold - s_bi
    loss_final = jnp.maximum(npcl_1, npcl_2)
    res_ref[...] = (loss_final / float(batch)) * 0.1


# --------------------------------------------------------------------------- #
# Wrapper                                                                      #
# --------------------------------------------------------------------------- #
def _device_kind():
    try:
        return jax.devices()[0].device_kind.lower()
    except Exception:
        return ""


def npc_loss(output, target, epsilon):
    """output: (B, C) float logits (any float dtype); target: (B,) int labels."""
    B, C = output.shape
    target2d = target.astype(jnp.int32).reshape(B, 1)

    kind = _device_kind()
    # v5e/v6e: 128 MiB physical VMEM -> larger tiles / scoped limit are safe.
    # v7x (64 MiB physical) or unknown: stay conservative.
    big_vmem = ("v5" in kind) or ("v6" in kind)
    # bf16-capable EUP on v6e/v7x; keep f32 exp on v5e/older.
    use_bf16_exp = ("v6" in kind) or ("v7" in kind)
    # TODO(synk): validate bf16-exp logsumexp tolerance vs the f32 reference
    #             before relying on it in training.

    max_tc = 2048 if big_vmem else 1024
    vmem_limit = (64 if big_vmem else 32) * 1024 * 1024

    # ----- stage 1: per-sample loss / margin ---------------------------------
    # Class chunk: full width for small C, otherwise a lane-aligned chunk with a
    # masked cdiv tail (no more full-width fallback for large ragged vocabs).
    if C <= max_tc:
        TC = C
    else:
        TC = next((tc for tc in range(max_tc, 127, -128) if C % tc == 0), max_tc)
    ragged = (C % TC) != 0
    n_chunks = pl.cdiv(C, TC)

    # Batch tile: prefer >=2 programs on the "parallel" axis (2 TCs on v7x).
    tb_cands = (512, 256, 128, 64, 32, 16, 8) if big_vmem else (256, 128, 64, 32, 16, 8)
    TB = next((c for c in tb_cands if B % c == 0 and 2 * c <= B), None)
    if TB is None:
        TB = next((c for c in tb_cands if B % c == 0), B)

    grid = (B // TB, n_chunks)
    loss, margin = pl.pallas_call(
        functools.partial(_per_sample_kernel, num_classes=C, ragged=ragged,
                          use_bf16_exp=use_bf16_exp),
        out_shape=(jax.ShapeDtypeStruct((B, 1), jnp.float32),
                   jax.ShapeDtypeStruct((B, 1), jnp.float32)),
        grid=grid,
        in_specs=[
            pl.BlockSpec((TB, TC), lambda b, c: (b, c)),
            pl.BlockSpec((TB, 1), lambda b, c: (b, 0)),
        ],
        out_specs=(
            pl.BlockSpec((TB, 1), lambda b, c: (b, 0)),
            pl.BlockSpec((TB, 1), lambda b, c: (b, 0)),
        ),
        scratch_shapes=[
            pltpu.VMEM((TB, 1), jnp.float32),   # running max (top-1)
            pltpu.VMEM((TB, 1), jnp.float32),   # running top-2 second value
            pltpu.VMEM((TB, 1), jnp.float32),   # running target logit
            pltpu.VMEM((TB, 1), jnp.float32),   # running rescaled exp-sum
        ],
        compiler_params=pltpu.CompilerParams(
            dimension_semantics=("parallel", "arbitrary"),
            vmem_limit_bytes=vmem_limit),
        cost_estimate=pl.CostEstimate(
            flops=8 * B * C,
            transcendentals=B * C + 2 * B,
            bytes_accessed=B * C * output.dtype.itemsize + 12 * B),
    )(output, target2d)            # native dtype in; f32 cast happens in-kernel

    # ----- stage 2: threshold + selection + scalar reduce --------------------
    # Row tile bounded by a VMEM budget for the (TI, B) temporaries
    # (~6 bytes/element: f32 bf + bool before/tie), not just divisibility.
    ti_budget = (8 if big_vmem else 4) * 1024 * 1024
    ti_cands = (512, 256, 128, 64, 32, 16, 8)
    TI = next((c for c in ti_cands if B % c == 0 and 6 * c * B <= ti_budget), None)
    if TI is None:
        TI = next((c for c in reversed(ti_cands) if B % c == 0), B)
    num_tiles = B // TI
    l_row = loss.reshape(1, B)     # row-major (B,1)->(1,B): free relayout outside

    res = pl.pallas_call(
        functools.partial(_selection_kernel, batch=B, row_tile=TI,
                          num_tiles=num_tiles, epsilon=float(epsilon)),
        out_shape=jax.ShapeDtypeStruct((1, 1), jnp.float32),
        in_specs=[
            pl.BlockSpec(memory_space=pltpu.MemorySpace.VMEM),
            pl.BlockSpec(memory_space=pltpu.MemorySpace.VMEM),
            pl.BlockSpec(memory_space=pltpu.MemorySpace.VMEM),
        ],
        out_specs=pl.BlockSpec(memory_space=pltpu.MemorySpace.VMEM),
    )(l_row, loss, margin)
    return res[0, 0]


if __name__ == "__main__":
    key = jax.random.PRNGKey(0)
    k_logits, k_target = jax.random.split(key)

    B, C = 8, 16
    output = jax.random.normal(k_logits, (B, C), dtype=jnp.float32)
    target = jax.random.randint(k_target, (B,), 0, C)

    result = npc_loss(output, target, epsilon=0.1)
    jax.block_until_ready(result)
    print("KERNEL_OK")
</pallas_src>

<mosaic_0001>
module attributes {stable_mosaic.version = 11 : i64} {
  func.func @_per_sample_kernel(%arg0: i32, %arg1: i32, %arg2: memref<8x16xf32, #tpu.memory_space<vmem>>, %arg3: memref<8x1xi32, #tpu.memory_space<vmem>>, %arg4: memref<8x1xf32, #tpu.memory_space<vmem>>, %arg5: memref<8x1xf32, #tpu.memory_space<vmem>>, %arg6: memref<8x1xf32, #tpu.memory_space<vmem>>, %arg7: memref<8x1xf32, #tpu.memory_space<vmem>>, %arg8: memref<8x1xf32, #tpu.memory_space<vmem>>, %arg9: memref<8x1xf32, #tpu.memory_space<vmem>>) attributes {dimension_semantics = [#tpu.dimension_semantics<parallel>, #tpu.dimension_semantics<arbitrary>], iteration_bounds = array<i64: 1, 1>, scalar_prefetch = 0 : i64, scratch_operands = 4 : i64, tpu.core_type = #tpu.core_type<tc>, window_params = [{transform_indices = @transform_0, window_bounds = array<i64: 8, 16>}, {transform_indices = @transform_1, window_bounds = array<i64: 8, 1>}, {transform_indices = @transform_2, window_bounds = array<i64: 8, 1>}, {transform_indices = @transform_3, window_bounds = array<i64: 8, 1>}]} {
    %c0_i32 = arith.constant 0 : i32
    %0 = arith.cmpi eq, %arg1, %c0_i32 : i32
    %1 = arith.extui %0 : i1 to i32
    %c0_i32_0 = arith.constant 0 : i32
    %2 = arith.cmpi ne, %1, %c0_i32_0 : i32
    scf.if %2 {
      %cst_29 = arith.constant 0xFF800000 : f32
      %55 = vector.broadcast %cst_29 : f32 to vector<8x1xf32>
      %c0_30 = arith.constant 0 : index
      %c0_31 = arith.constant 0 : index
      %56 = vector.load %arg6[%c0_30, %c0_31] : memref<8x1xf32, #tpu.memory_space<vmem>>, vector<8x1xf32>
      tpu.vector_store %arg6[%c0_30, %c0_31], %55 {strides = array<i32>} : memref<8x1xf32, #tpu.memory_space<vmem>>, vector<8x1xf32>,
      %cst_32 = arith.constant 0xFF800000 : f32
      %57 = vector.broadcast %cst_32 : f32 to vector<8x1xf32>
      %c0_33 = arith.constant 0 : index
      %c0_34 = arith.constant 0 : index
      %58 = vector.load %arg7[%c0_33, %c0_34] : memref<8x1xf32, #tpu.memory_space<vmem>>, vector<8x1xf32>
      tpu.vector_store %arg7[%c0_33, %c0_34], %57 {strides = array<i32>} : memref<8x1xf32, #tpu.memory_space<vmem>>, vector<8x1xf32>,
      %cst_35 = arith.constant 0.000000e+00 : f32
      %59 = vector.broadcast %cst_35 : f32 to vector<8x1xf32>
      %c0_36 = arith.constant 0 : index
      %c0_37 = arith.constant 0 : index
      %60 = vector.load %arg8[%c0_36, %c0_37] : memref<8x1xf32, #tpu.memory_space<vmem>>, vector<8x1xf32>
      tpu.vector_store %arg8[%c0_36, %c0_37], %59 {strides = array<i32>} : memref<8x1xf32, #tpu.memory_space<vmem>>, vector<8x1xf32>,
      %cst_38 = arith.constant 0.000000e+00 : f32
      %61 = vector.broadcast %cst_38 : f32 to vector<8x1xf32>
      %c0_39 = arith.constant 0 : index
      %c0_40 = arith.constant 0 : index
      %62 = vector.load %arg9[%c0_39, %c0_40] : memref<8x1xf32, #tpu.memory_space<vmem>>, vector<8x1xf32>
      tpu.vector_store %arg9[%c0_39, %c0_40], %61 {strides = array<i32>} : memref<8x1xf32, #tpu.memory_space<vmem>>, vector<8x1xf32>,
    } else {
    }
    %c0 = arith.constant 0 : index
    %c0_1 = arith.constant 0 : index
    %3 = vector.load %arg2[%c0, %c0_1] : memref<8x16xf32, #tpu.memory_space<vmem>>, vector<8x16xf32>
    %c0_2 = arith.constant 0 : index
    %c0_3 = arith.constant 0 : index
    %4 = vector.load %arg3[%c0_2, %c0_3] : memref<8x1xi32, #tpu.memory_space<vmem>>, vector<8x1xi32>
    %5 = tpu.iota {dimensions = array<i32: 1>} : vector<8x16xi32>
    %c16_i32 = arith.constant 16 : i32
    %6 = arith.muli %arg1, %c16_i32 : i32
    %7 = vector.broadcast %6 : i32 to vector<8x16xi32>
    %8 = arith.addi %5, %7 : vector<8x16xi32>
    %9 = vector.broadcast %4 : vector<8x1xi32> to vector<8x16xi32>
    %10 = arith.cmpi eq, %8, %9 : vector<8x16xi32>
    %c0_4 = arith.constant 0 : index
    %c0_5 = arith.constant 0 : index
    %11 = vector.load %arg8[%c0_4, %c0_5] : memref<8x1xf32, #tpu.memory_space<vmem>>, vector<8x1xf32>
    %cst = arith.constant 0.000000e+00 : f32
    %12 = vector.broadcast %cst : f32 to vector<8x16xf32>
    %13 = arith.select %10, %3, %12 : vector<8x16xi1>, vector<8x16xf32>
    %cst_6 = arith.constant dense<0.000000e+00> : vector<8xf32>
    %14 = vector.multi_reduction <add>, %13, %cst_6 [1] : vector<8x16xf32> to vector<8xf32>
    %15 = vector.shape_cast %14 : vector<8xf32> to vector<8x1xf32>
    %16 = arith.addf %11, %15 : vector<8x1xf32>
    %c0_7 = arith.constant 0 : index
    %c0_8 = arith.constant 0 : index
    %17 = vector.load %arg8[%c0_7, %c0_8] : memref<8x1xf32, #tpu.memory_space<vmem>>, vector<8x1xf32>
    tpu.vector_store %arg8[%c0_7, %c0_8], %16 {strides = array<i32>} : memref<8x1xf32, #tpu.memory_space<vmem>>, vector<8x1xf32>,
    %cst_9 = arith.constant dense<0xFF800000> : vector<8xf32>
    %18 = vector.multi_reduction <maximumf>, %3, %cst_9 [1] : vector<8x16xf32> to vector<8xf32>
    %19 = vector.shape_cast %18 : vector<8xf32> to vector<8x1xf32>
    %20 = vector.broadcast %19 : vector<8x1xf32> to vector<8x16xf32>
    %21 = arith.cmpf oeq, %3, %20 : vector<8x16xf32>
    %22 = arith.extui %21 : vector<8x16xi1> to vector<8x16xi32>
    %23 = arith.sitofp %22 : vector<8x16xi32> to vector<8x16xf32>
    %cst_10 = arith.constant dense<0.000000e+00> : vector<8xf32>
    %24 = vector.multi_reduction <add>, %23, %cst_10 [1] : vector<8x16xf32> to vector<8xf32>
    %25 = vector.shape_cast %24 : vector<8xf32> to vector<8x1xf32>
    %cst_11 = arith.constant 0xFF800000 : f32
    %26 = vector.broadcast %cst_11 : f32 to vector<8x16xf32>
    %27 = arith.select %21, %26, %3 : vector<8x16xi1>, vector<8x16xf32>
    %cst_12 = arith.constant dense<0xFF800000> : vector<8xf32>
    %28 = vector.multi_reduction <maximumf>, %27, %cst_12 [1] : vector<8x16xf32> to vector<8xf32>
    %29 = vector.shape_cast %28 : vector<8xf32> to vector<8x1xf32>
    %cst_13 = arith.constant 2.000000e+00 : f32
    %30 = vector.broadcast %cst_13 : f32 to vector<8x1xf32>
    %31 = arith.cmpf oge, %25, %30 : vector<8x1xf32>
    %32 = arith.select %31, %19, %29 : vector<8x1xi1>, vector<8x1xf32>
    %c0_14 = arith.constant 0 : index
    %c0_15 = arith.constant 0 : index
    %33 = vector.load %arg6[%c0_14, %c0_15] : memref<8x1xf32, #tpu.memory_space<vmem>>, vector<8x1xf32>
    %c0_16 = arith.constant 0 : index
    %c0_17 = arith.constant 0 : index
    %34 = vector.load %arg7[%c0_16, %c0_17] : memref<8x1xf32, #tpu.memory_space<vmem>>, vector<8x1xf32>
    %35 = arith.maximumf %33, %19 : vector<8x1xf32>
    %36 = arith.minimumf %33, %19 : vector<8x1xf32>
    %37 = arith.maximumf %34, %32 : vector<8x1xf32>
    %38 = arith.maximumf %36, %37 : vector<8x1xf32>
    %39 = vector.broadcast %35 : vector<8x1xf32> to vector<8x16xf32>
    %40 = arith.subf %3, %39 : vector<8x16xf32>
    %41 = math.exp %40 : vector<8x16xf32>
    %c0_18 = arith.constant 0 : index
    %c0_19 = arith.constant 0 : index
    %42 = vector.load %arg9[%c0_18, %c0_19] : memref<8x1xf32, #tpu.memory_space<vmem>>, vector<8x1xf32>
    %43 = arith.subf %33, %35 : vector<8x1xf32>
    %44 = math.exp %43 : vector<8x1xf32>
    %45 = arith.mulf %42, %44 : vector<8x1xf32>
    %cst_20 = arith.constant dense<0.000000e+00> : vector<8xf32>
    %46 = vector.multi_reduction <add>, %41, %cst_20 [1] : vector<8x16xf32> to vector<8xf32>
    %47 = vector.shape_cast %46 : vector<8xf32> to vector<8x1xf32>
    %48 = arith.addf %45, %47 : vector<8x1xf32>
    %c0_21 = arith.constant 0 : index
    %c0_22 = arith.constant 0 : index
    %49 = vector.load %arg9[%c0_21, %c0_22] : memref<8x1xf32, #tpu.memory_space<vmem>>, vector<8x1xf32>
    tpu.vector_store %arg9[%c0_21, %c0_22], %48 {strides = array<i32>} : memref<8x1xf32, #tpu.memory_space<vmem>>, vector<8x1xf32>,
    %c0_23 = arith.constant 0 : index
    %c0_24 = arith.constant 0 : index
    %50 = vector.load %arg6[%c0_23, %c0_24] : memref<8x1xf32, #tpu.memory_space<vmem>>, vector<8x1xf32>
    tpu.vector_store %arg6[%c0_23, %c0_24], %35 {strides = array<i32>} : memref<8x1xf32, #tpu.memory_space<vmem>>, vector<8x1xf32>,
    %c0_25 = arith.constant 0 : index
    %c0_26 = arith.constant 0 : index
    %51 = vector.load %arg7[%c0_25, %c0_26] : memref<8x1xf32, #tpu.memory_space<vmem>>, vector<8x1xf32>
    tpu.vector_store %arg7[%c0_25, %c0_26], %38 {strides = array<i32>} : memref<8x1xf32, #tpu.memory_space<vmem>>, vector<8x1xf32>,
    %c0_i32_27 = arith.constant 0 : i32
    %52 = arith.cmpi eq, %arg1, %c0_i32_27 : i32
    %53 = arith.extui %52 : i1 to i32
    %c0_i32_28 = arith.constant 0 : i32
    %54 = arith.cmpi ne, %53, %c0_i32_28 : i32
    scf.if %54 {
      %c0_29 = arith.constant 0 : index
      %c0_30 = arith.constant 0 : index
      %55 = vector.load %arg8[%c0_29, %c0_30] : memref<8x1xf32, #tpu.memory_space<vmem>>, vector<8x1xf32>
      %c0_31 = arith.constant 0 : index
      %c0_32 = arith.constant 0 : index
      %56 = vector.load %arg6[%c0_31, %c0_32] : memref<8x1xf32, #tpu.memory_space<vmem>>, vector<8x1xf32>
      %c0_33 = arith.constant 0 : index
      %c0_34 = arith.constant 0 : index
      %57 = vector.load %arg7[%c0_33, %c0_34] : memref<8x1xf32, #tpu.memory_space<vmem>>, vector<8x1xf32>
      %c0_35 = arith.constant 0 : index
      %c0_36 = arith.constant 0 : index
      %58 = vector.load %arg9[%c0_35, %c0_36] : memref<8x1xf32, #tpu.memory_space<vmem>>, vector<8x1xf32>
      %59 = math.log %58 : vector<8x1xf32>
      %60 = arith.addf %56, %59 : vector<8x1xf32>
      %61 = arith.subf %55, %56 : vector<8x1xf32>
      %62 = arith.subf %55, %57 : vector<8x1xf32>
      %cst_37 = arith.constant 0.000000e+00 : f32
      %63 = vector.broadcast %cst_37 : f32 to vector<8x1xf32>
      %64 = arith.cmpf ogt, %61, %63 : vector<8x1xf32>
      %65 = arith.select %64, %61, %62 : vector<8x1xi1>, vector<8x1xf32>
      %cst_38 = arith.constant 1.000000e+00 : f32
      %66 = vector.broadcast %cst_38 : f32 to vector<8x1xf32>
      %67 = arith.subf %66, %65 : vector<8x1xf32>
      %cst_39 = arith.constant 0.000000e+00 : f32
      %68 = vector.broadcast %cst_39 : f32 to vector<8x1xf32>
      %69 = arith.maximumf %67, %68 : vector<8x1xf32>
      %cst_40 = arith.constant 1.000000e+00 : f32
      %70 = vector.broadcast %cst_40 : f32 to vector<8x1xf32>
      %71 = arith.subf %70, %55 : vector<8x1xf32>
      %72 = arith.addf %71, %60 : vector<8x1xf32>
      %cst_41 = arith.constant 0.000000e+00 : f32
      %73 = vector.broadcast %cst_41 : f32 to vector<8x1xf32>
      %74 = arith.maximumf %72, %73 : vector<8x1xf32>
      %cst_42 = arith.constant 0.000000e+00 : f32
      %75 = vector.broadcast %cst_42 : f32 to vector<8x1xf32>
      %76 = arith.cmpf oge, %65, %75 : vector<8x1xf32>
      %77 = arith.select %76, %69, %74 : vector<8x1xi1>, vector<8x1xf32>
      %c0_43 = arith.constant 0 : index
      %c0_44 = arith.constant 0 : index
      %78 = vector.load %arg4[%c0_43, %c0_44] : memref<8x1xf32, #tpu.memory_space<vmem>>, vector<8x1xf32>
      tpu.vector_store %arg4[%c0_43, %c0_44], %77 {strides = array<i32>} : memref<8x1xf32, #tpu.memory_space<vmem>>, vector<8x1xf32>,
      %c0_45 = arith.constant 0 : index
      %c0_46 = arith.constant 0 : index
      %79 = vector.load %arg5[%c0_45, %c0_46] : memref<8x1xf32, #tpu.memory_space<vmem>>, vector<8x1xf32>
      tpu.vector_store %arg5[%c0_45, %c0_46], %65 {strides = array<i32>} : memref<8x1xf32, #tpu.memory_space<vmem>>, vector<8x1xf32>,
    } else {
    }
    return
  }
  func.func @transform_0(%arg0: i32, %arg1: i32) -> (i32, i32) {
    %c0_i32 = arith.constant 0 : i32
    return %arg0, %arg1 : i32, i32
  }
  func.func @transform_1(%arg0: i32, %arg1: i32) -> (i32, i32) {
    %c0_i32 = arith.constant 0 : i32
    %c0_i32_0 = arith.constant 0 : i32
    return %arg0, %c0_i32 : i32, i32
  }
  func.func @transform_2(%arg0: i32, %arg1: i32) -> (i32, i32) {
    %c0_i32 = arith.constant 0 : i32
    %c0_i32_0 = arith.constant 0 : i32
    return %arg0, %c0_i32 : i32, i32
  }
  func.func @transform_3(%arg0: i32, %arg1: i32) -> (i32, i32) {
    %c0_i32 = arith.constant 0 : i32
    %c0_i32_0 = arith.constant 0 : i32
    return %arg0, %c0_i32 : i32, i32
  }
}

</mosaic_0001>

<llo_original>
// kernel: tpu_custom_call.1
$region0: #{tpu_custom_call.1}
  #allocation0 [shape = 'u32[]', space=smem, size = 0x4, offset = 0x4, fixed_abs, tag = 'smem constant byte address 0x4 - core index']
  #allocation1 [shape = 'u32[144,128]{1,0:T(1,128)}', space=vmem, size = 0x12000, scoped, tag = 'internal scratch']
  #allocation2 [shape = 'f32[8,1]{1,0:T(8,128)}', space=vmem, size = 0x1000, scoped, tag = 'scratch operand']
  #allocation3 [shape = 'f32[8,1]{1,0:T(8,128)}', space=vmem, size = 0x1000, scoped, tag = 'scratch operand']
  #allocation4 [shape = 'f32[8,1]{1,0:T(8,128)}', space=vmem, size = 0x1000, scoped, tag = 'scratch operand']
  #allocation5 [shape = 'f32[8,1]{1,0:T(8,128)}', space=vmem, size = 0x1000, scoped, tag = 'scratch operand']
  %s0 = inlined_call_operand.vmem [shape: f32[8,16], index: 0, kind: input, shape index: {}]
  %s1 = inlined_call_operand.vmem [shape: s32[8,1], index: 1, kind: input, shape index: {}]
  %s2 = inlined_call_operand.vmem [shape: f32[8,1], index: 2, kind: output, shape index: {0}]
  %s3 = inlined_call_operand.vmem [shape: f32[8,1], index: 3, kind: output, shape index: {1}]
  %4 = xla_tuple %s2, %s3
  %s5 = sld [smem:[#allocation0]]
  $region34: #{tpu_custom_call.1} parent=0
    _
  %s7 = ssub.s32 1, %s5
  %s8 = scalar_select 0, %s7, %s5
  // Predicated region
  $region2: #{tpu_custom_call.1} parent=0 // pred_check
    _
  $region3: #{tpu_custom_call.1} parent=0 // pred_check_branch
    %10 = sbr.rel (0) target = $region5
  $region4: #{tpu_custom_call.1} parent=0 // pred_region
    _
  $region5: #{tpu_custom_call.1} parent=0 // pred_fallthru
    _
  // Predicated region
  $region6: #{tpu_custom_call.1} parent=0 // pred_check
    _
  $region7: #{tpu_custom_call.1} parent=0 // pred_check_branch
    %12 = sbr.rel (0) target = $region9
  $region8: #{tpu_custom_call.1} parent=0 // pred_region
    _
  $region9: #{tpu_custom_call.1} parent=0 // pred_fallthru
    _
  %p13 = scmp.eq.s32.totalorder 0, 0
  // Predicated region
  $region10: #{tpu_custom_call.1} parent=0 // pred_check
    %p14 = pneg %p13
  $region11: #{tpu_custom_call.1} parent=0 // pred_check_branch
    %16 = sbr.rel (%p14) target = $region13
  $region12: #{tpu_custom_call.1} parent=0 // pred_region
    %vm17 = vcmask 7168
    %18 = vst.msk [vmem:[#allocation2] sm:$0xff] %vm17, -inf
    %19 = vst.msk [vmem:[#allocation3] sm:$0xff] %vm17, -inf
    %20 = vst.msk [vmem:[#allocation4] sm:$0xff] %vm17, 0.0
    %21 = vst.msk [vmem:[#allocation5] sm:$0xff] %vm17, 0.0
  $region13: #{tpu_custom_call.1} parent=0 // pred_fallthru
    _
  %v22 = vld [vmem:[%s0] sm:$0xff]
  %v23 = vld [vmem:[%s1] sm:$0xff]
  %v24 = vlaneseq
  %v25 = vand.u32 %v24, 127
  %s26 = smul.u32 0, 16
  %v27 = vstv %s26
  %v28 = vadd.s32 %v25, %v27
  %29 = vset.pattern.permute.xlu0 0
  %30 = vperm.xlu0 %29, %v23
  %v31 = vpop.permute.xlu0 %30
  %vm32 = vcmp.eq.s32.totalorder %v28, %v31
  %v33 = vld [vmem:[#allocation4] sm:$0xff]
  %v34 = vsel %vm32, %v22, 0.0
  %vm35 = vcmask 130048
  %v36 = vsel %vm35, %v34, 0.0
  %37 = vadd.xlane.f32.xlu0 %v36
  %v38 = vpop.xlane.xlu0 %37
  %v39 = vadd.f32 %v33, %v38
  %vm40 = vcmask 7168
  %41 = vst.msk [vmem:[#allocation4] sm:$0xff] %vm40, %v39
  %v42 = vsel %vm35, %v22, -inf
  %43 = vmax.xlane.f32.xlu0 %v42
  %v44 = vpop.xlane.xlu0 %43
  %vm45 = vcmp.eq.f32.partialorder %v22, %v44
  %v46 = vsel %vm45, 1, 0
  %v47 = vcvt.s32.f32 %v46
  %v48 = vsel %vm35, %v47, 0.0
  %49 = vadd.xlane.f32.xlu0 %v48
  %v50 = vpop.xlane.xlu0 %49
  %v51 = vsel %vm45, -inf, %v22
  %v52 = vsel %vm35, %v51, -inf
  %53 = vmax.xlane.f32.xlu0 %v52
  %v54 = vpop.xlane.xlu0 %53
  %vm55 = vcmp.ge.f32.partialorder %v50, 2.0
  %v56 = vsel %vm55, %v44, %v54
  %v57 = vld [vmem:[#allocation2] sm:$0xff]
  %v58 = vld [vmem:[#allocation3] sm:$0xff]
  %v59 = vmax.f32 %v57, %v44
  %v60 = vmin.f32 %v57, %v44
  %v61 = vmax.f32 %v58, %v56
  %v62 = vmax.f32 %v60, %v61
  %64 = vset.pattern.permute.xlu0 0
  %65 = vperm.xlu0 %64, %v59
  %v66 = vpop.permute.xlu0 %65
  %v68 = vsub.f32 %v22, %v66
  %v69 = vmul.f32 %v68, 1.442695
  %v70 = vpow.pop %v69
  %v71 = vld [vmem:[#allocation5] sm:$0xff]
  %v72 = vsub.f32 %v57, %v59
  %v73 = vmul.f32 %v72, 1.442695
  %v74 = vpow.pop %v73
  %v75 = vmul.f32 %v71, %v74
  %v76 = vsel %vm35, %v70, 0.0
  %77 = vadd.xlane.f32.xlu0 %v76
  %v78 = vpop.xlane.xlu0 %77
  %v79 = vadd.f32 %v75, %v78
  %80 = vst.msk [vmem:[#allocation5] sm:$0xff] %vm40, %v79
  %81 = vst.msk [vmem:[#allocation2] sm:$0xff] %vm40, %v59
  %82 = vst.msk [vmem:[#allocation3] sm:$0xff] %vm40, %v62
  // Predicated region
  $region14: #{tpu_custom_call.1} parent=0 // pred_check
    %p83 = pneg %p13
  $region15: #{tpu_custom_call.1} parent=0 // pred_check_branch
    %85 = sbr.rel (%p83) target = $region17
  $region16: #{tpu_custom_call.1} parent=0 // pred_region
    %v86 = vld [vmem:[#allocation4] sm:$0xff]
    %v87 = vld [vmem:[#allocation2] sm:$0xff]
    %v88 = vld [vmem:[#allocation3] sm:$0xff]
    %v89 = vld [vmem:[#allocation5] sm:$0xff]
    %v90 = vlog2.pop %v89
    %v91 = vmul.f32 %v90, 0.6931472
    %v92 = vadd.f32 %v87, %v91
    %v93 = vsub.f32 %v86, %v87
    %v94 = vsub.f32 %v86, %v88
    %vm95 = vcmp.gt.f32.partialorder %v93, 0.0
    %v96 = vsel %vm95, %v93, %v94
    %v97 = vsub.f32 1.0, %v96
    %v98 = vmax.f32 %v97, 0.0
    %v99 = vsub.f32 1.0, %v86
    %v100 = vadd.f32 %v99, %v92
    %v101 = vmax.f32 %v100, 0.0
    %vm102 = vcmp.ge.f32.partialorder %v96, 0.0
    %v103 = vsel %vm102, %v98, %v101
    %104 = vst.msk [vmem:[%s2] sm:$0xff] %vm40, %v103
    %105 = vst.msk [vmem:[%s3] sm:$0xff] %vm40, %v96
  $region17: #{tpu_custom_call.1} parent=0 // pred_fallthru
    _
  // Predicated region
  $region18: #{tpu_custom_call.1} parent=0 // pred_check
    _
  $region19: #{tpu_custom_call.1} parent=0 // pred_check_branch
    %107 = sbr.rel (0) target = $region21
  $region20: #{tpu_custom_call.1} parent=0 // pred_region
    _
  $region21: #{tpu_custom_call.1} parent=0 // pred_fallthru
    _
  // Predicated region
  $region22: #{tpu_custom_call.1} parent=0 // pred_check
    _
  $region23: #{tpu_custom_call.1} parent=0 // pred_check_branch
    %109 = sbr.rel (0) target = $region25
  $region24: #{tpu_custom_call.1} parent=0 // pred_region
    _
  $region25: #{tpu_custom_call.1} parent=0 // pred_fallthru
    _
  // Predicated region
  $region26: #{tpu_custom_call.1} parent=0 // pred_check
    _
  $region27: #{tpu_custom_call.1} parent=0 // pred_check_branch
    %111 = sbr.rel (0) target = $region29
  $region28: #{tpu_custom_call.1} parent=0 // pred_region
    _
  $region29: #{tpu_custom_call.1} parent=0 // pred_fallthru
    _
  // Predicated region
  $region30: #{tpu_custom_call.1} parent=0 // pred_check
    _
  $region31: #{tpu_custom_call.1} parent=0 // pred_check_branch
    %113 = sbr.rel (0) target = $region33
  $region32: #{tpu_custom_call.1} parent=0 // pred_region
    _
  $region33: #{tpu_custom_call.1} parent=0 // pred_fallthru
    _

</llo_original>
